<compile_context>
chip_gen: v7x
topology: tpu7x:2x2x1
jax: 0.10.0
libtpu: 0.0.40
codegen_flags: <defaults>
</compile_context>

<pallas_src>
import numpy as np
import jax
import jax.numpy as jnp
from jax.experimental import pallas as pl
from jax.experimental.pallas import tpu as pltpu


# ----------------------------------------------------------------------------- glue
def sobol_1d(n: int) -> np.ndarray:
    """1-D Sobol sequence in [0,1) (same sequence as torch.quasirandom.SobolEngine(1))."""
    maxbit = 32
    v = [1 << (maxbit - k) for k in range(1, maxbit + 1)]  # direction numbers 2^-k
    x = np.zeros(n, dtype=np.float64)
    cur = 0
    for i in range(1, n):
        m = i - 1
        c = 0
        while m & 1:  # index of lowest zero bit of (i-1)
            m >>= 1
            c += 1
        cur ^= v[c]
        x[i] = cur / float(1 << maxbit)
    return x


# ---------------------------------------------------------------------------- kernel
def unary_mul_kernel(bs_ref, x_ref, o_ref):
    # bs_ref[0] is the BSGen bit at rng_idx=0 (host-computed scalar in SMEM).
    # out = x & bs | (1-x) & (1-bs)  ==  bs ? x : 1-x   for x in {0,1}.
    @pl.when(bs_ref[0] != 0)
    def _():
        o_ref[...] = x_ref[...].astype(o_ref.dtype)           # hot path: pure copy

    @pl.when(bs_ref[0] == 0)
    def _():
        o_ref[...] = (1.0 - x_ref[...]).astype(o_ref.dtype)   # bipolar-inverse path


# --------------------------------------------------------------------------- wrapper
def unary_mul(x_nchw: jax.Array, input_prob_1: float, bitwidth: int = 8,
              mode: str = "bipolar") -> jax.Array:
    assert mode == "bipolar"
    seq_len = 2 ** bitwidth

    # RNG (Sobol) + SourceGen + BSGen(rng_idx=0) — pure scalar setup, done host-side.
    rng_seq = sobol_1d(seq_len) * seq_len
    source = np.round((np.float32(input_prob_1) + 1.0) / 2.0 * seq_len)
    bs_bit = np.int32(source > rng_seq[0])          # bs_inv is identical at idx 0

    # Flatten NCHW -> lane-dense 2-D slab (rows, 128), padded to whole tiles.
    orig_shape = x_nchw.shape
    n_elem = int(np.prod(orig_shape))
    lanes = 128
    in_dtype = x_nchw.dtype                         # keep input bytes as-is (no astype copy)

    rows_needed = -(-n_elem // lanes)               # ceil(n_elem / 128)
    max_full_rows = 4096                            # 4096*128*4B = 2 MiB: single-block path
    if rows_needed <= max_full_rows:
        # Small/medium: one full-array block, one DMA in / one DMA out.
        tile_r = max(8, -(-rows_needed // 8) * 8)   # pad rows to a multiple of 8
        rows = tile_r
    else:
        # Large: 1024-row tiles (512 KiB/block f32); in+out double-buffered ~= 2 MiB,
        # well under the 32 MiB scoped-VMEM default on every generation.
        tile_r = 1024
        rows = -(-rows_needed // tile_r) * tile_r
    grid = (rows // tile_r,)

    pad = rows * lanes - n_elem
    x_flat = jnp.ravel(x_nchw)
    if pad:
        x_flat = jnp.concatenate([x_flat, jnp.zeros((pad,), dtype=in_dtype)])
    x2d = x_flat.reshape(rows, lanes)

    out2d = pl.pallas_call(
        unary_mul_kernel,
        out_shape=jax.ShapeDtypeStruct((rows, lanes), jnp.float32),   # stype = torch.float
        grid=grid,
        in_specs=[
            pl.BlockSpec(memory_space=pltpu.MemorySpace.SMEM),        # bs bit (scalar)
            pl.BlockSpec((tile_r, lanes), lambda i: (i, 0)),          # input bits
        ],
        out_specs=pl.BlockSpec((tile_r, lanes), lambda i: (i, 0)),
        compiler_params=pltpu.CompilerParams(dimension_semantics=("parallel",)),
    )(
        jnp.asarray([bs_bit], dtype=jnp.int32),
        x2d,
    )
    return out2d.reshape(-1)[:n_elem].reshape(orig_shape)


# -------------------------------------------------------------------------- reference
def unary_mul_ref(x_nchw, input_prob_1, bitwidth=8):
    seq_len = 2 ** bitwidth
    rng_seq = sobol_1d(seq_len) * seq_len
    source = np.round((np.float32(input_prob_1) + 1.0) / 2.0 * seq_len)
    bs_bit = np.int32(source > rng_seq[0])
    x = np.asarray(x_nchw).astype(np.int32)
    path_0 = x & bs_bit
    path_1 = (1 - x) & (1 - bs_bit)
    return (path_0 | path_1).astype(np.float32)


if __name__ == "__main__":
    key = jax.random.PRNGKey(0)

    # Case 1: tile-aligned NCHW bit tensor, bs_bit == 1 (copy path).
    x = jax.random.bernoulli(key, 0.5, shape=(2, 4, 16, 16)).astype(jnp.float32)
    out = jax.block_until_ready(unary_mul(x, 0.3, bitwidth=8, mode="bipolar"))
    np.testing.assert_allclose(np.asarray(out), unary_mul_ref(x, 0.3), rtol=0, atol=0)
    assert out.shape == (2, 4, 16, 16) and out.dtype == jnp.float32

    # Case 2: bs_bit == 0 (input_prob_1 = -1 -> source = 0), exercises the 1-x path.
    out_inv = jax.block_until_ready(unary_mul(x, -1.0, bitwidth=8, mode="bipolar"))
    np.testing.assert_allclose(np.asarray(out_inv), unary_mul_ref(x, -1.0), rtol=0, atol=0)

    # Case 3: non-tile-aligned shape, exercises the padding path.
    key2 = jax.random.PRNGKey(0)
    x_odd = jax.random.bernoulli(key2, 0.5, shape=(2, 3, 5, 7)).astype(jnp.float32)
    out_odd = jax.block_until_ready(unary_mul(x_odd, 0.3, bitwidth=8, mode="bipolar"))
    np.testing.assert_allclose(np.asarray(out_odd), unary_mul_ref(x_odd, 0.3), rtol=0, atol=0)
    assert out_odd.shape == (2, 3, 5, 7) and out_odd.dtype == jnp.float32

    print("KERNEL_OK")
</pallas_src>

<mosaic_0001>
module attributes {stable_mosaic.version = 11 : i64} {
  func.func @unary_mul_kernel(%arg0: i32, %arg1: memref<1xi32, #tpu.memory_space<smem>>, %arg2: memref<16x128xf32, #tpu.memory_space<vmem>>, %arg3: memref<16x128xf32, #tpu.memory_space<vmem>>) attributes {dimension_semantics = [#tpu.dimension_semantics<parallel>], iteration_bounds = array<i64: 1>, scalar_prefetch = 0 : i64, scratch_operands = 0 : i64, tpu.core_type = #tpu.core_type<tc>, window_params = [{transform_indices = @transform_0, window_bounds = array<i64: 1>}, {transform_indices = @transform_1, window_bounds = array<i64: 16, 128>}, {transform_indices = @transform_2, window_bounds = array<i64: 16, 128>}]} {
    %c0 = arith.constant 0 : index
    %0 = memref.load %arg1[%c0] : memref<1xi32, #tpu.memory_space<smem>>
    %c0_i32 = arith.constant 0 : i32
    %1 = arith.cmpi ne, %0, %c0_i32 : i32
    %2 = arith.extui %1 : i1 to i32
    %c0_i32_0 = arith.constant 0 : i32
    %3 = arith.cmpi ne, %2, %c0_i32_0 : i32
    scf.if %3 {
      %c0_4 = arith.constant 0 : index
      %c0_5 = arith.constant 0 : index
      %8 = vector.load %arg2[%c0_4, %c0_5] : memref<16x128xf32, #tpu.memory_space<vmem>>, vector<16x128xf32>
      %c0_6 = arith.constant 0 : index
      %c0_7 = arith.constant 0 : index
      %9 = vector.load %arg3[%c0_6, %c0_7] : memref<16x128xf32, #tpu.memory_space<vmem>>, vector<16x128xf32>
      tpu.vector_store %arg3[%c0_6, %c0_7], %8 {strides = array<i32>} : memref<16x128xf32, #tpu.memory_space<vmem>>, vector<16x128xf32>,
    } else {
    }
    %c0_1 = arith.constant 0 : index
    %4 = memref.load %arg1[%c0_1] : memref<1xi32, #tpu.memory_space<smem>>
    %c0_i32_2 = arith.constant 0 : i32
    %5 = arith.cmpi eq, %4, %c0_i32_2 : i32
    %6 = arith.extui %5 : i1 to i32
    %c0_i32_3 = arith.constant 0 : i32
    %7 = arith.cmpi ne, %6, %c0_i32_3 : i32
    scf.if %7 {
      %c0_4 = arith.constant 0 : index
      %c0_5 = arith.constant 0 : index
      %8 = vector.load %arg2[%c0_4, %c0_5] : memref<16x128xf32, #tpu.memory_space<vmem>>, vector<16x128xf32>
      %cst = arith.constant 1.000000e+00 : f32
      %9 = vector.broadcast %cst : f32 to vector<16x128xf32>
      %10 = arith.subf %9, %8 : vector<16x128xf32>
      %c0_6 = arith.constant 0 : index
      %c0_7 = arith.constant 0 : index
      %11 = vector.load %arg3[%c0_6, %c0_7] : memref<16x128xf32, #tpu.memory_space<vmem>>, vector<16x128xf32>
      tpu.vector_store %arg3[%c0_6, %c0_7], %10 {strides = array<i32>} : memref<16x128xf32, #tpu.memory_space<vmem>>, vector<16x128xf32>,
    } else {
    }
    return
  }
  func.func @transform_0(%arg0: i32) -> i32 {
    %c0_i32 = arith.constant 0 : i32
    %c0_i32_0 = arith.constant 0 : i32
    return %c0_i32 : i32
  }
  func.func @transform_1(%arg0: i32) -> (i32, i32) {
    %c0_i32 = arith.constant 0 : i32
    %c0_i32_0 = arith.constant 0 : i32
    return %arg0, %c0_i32 : i32, i32
  }
  func.func @transform_2(%arg0: i32) -> (i32, i32) {
    %c0_i32 = arith.constant 0 : i32
    %c0_i32_0 = arith.constant 0 : i32
    return %arg0, %c0_i32 : i32, i32
  }
}

</mosaic_0001>

<llo_original>
// kernel: tpu_custom_call.1
$region0: #{tpu_custom_call.1}
  #allocation0 [shape = 'u32[]', space=smem, size = 0x4, offset = 0x4, fixed_abs, tag = 'smem constant byte address 0x4 - core index']
  #allocation1 [shape = 'u32[144,128]{1,0:T(1,128)}', space=vmem, size = 0x12000, scoped, tag = 'internal scratch']
  #allocation2 [shape = 's32[1]{0:T(128)S(6)}', space=smem, size = 0x200, scoped, tag = 'scoped memory for tpu_custom_call.1']
  %s0 = inlined_call_operand.<no memory space> [shape: s32[1], index: 0, kind: input, shape index: {}]
  %s1 = inlined_call_operand.hbm [shape: f32[16,128], index: 1, kind: input, shape index: {}]
  %s2 = inlined_call_operand.hbm [shape: f32[16,128], index: 2, kind: output, shape index: {}]
  %s3 = sld [smem:[#allocation0]]
  $region30: #{tpu_custom_call.1} parent=0
    _
  %s5 = ssub.s32 1, %s3
  %s6 = scalar_select 0, %s5, %s3
  %7 = sst [smem:[#allocation2]] %s0
  $region1: #{tpu_custom_call.1} parent=0
    #allocation3 [shape = 'u8[8192]{0}', space=vmem, size = 0x2000, scoped, tag = 'input window, operand 1, single buffered']
    #allocation4 [shape = 's32[1]{0}', space=sflag, size = 0x4, scoped, tag = 'scoped memory for tpu_custom_call.1']
    #allocation5 [shape = 's32[1]{0}', space=sflag, size = 0x4, scoped, tag = 'scoped memory for tpu_custom_call.1']
    #allocation6 [shape = 'u8[8192]{0}', space=vmem, size = 0x2000, scoped, tag = 'output window, operand 0, single buffered']
    %8 = vsyncpa [#allocation4], 0
    %9 = vsyncpa [#allocation5], 0
    // Predicated region
    $region2: #{tpu_custom_call.1} parent=1 // pred_check
      _
    $region3: #{tpu_custom_call.1} parent=1 // pred_check_branch
      %11 = sbr.rel (0) target = $region5
    $region4: #{tpu_custom_call.1} parent=1 // pred_region
      _
    $region5: #{tpu_custom_call.1} parent=1 // pred_fallthru
      _
    // Predicated region
    $region6: #{tpu_custom_call.1} parent=1 // pred_check
      _
    $region7: #{tpu_custom_call.1} parent=1 // pred_check_branch
      %13 = sbr.rel (0) target = $region9
    $region8: #{tpu_custom_call.1} parent=1 // pred_region
      %s15 = ssub.s32 256, 256
      %16 = vsyncadd [#allocation4], %s15
      %s17 = sshll.u32 [#allocation3], 4
      %s18 = int_to_ptr.vmem [resolvable:$true] %s17
      %23 = dma.hbm_to_vmem [thread:$0]  %s1, 256, %s18, [#allocation4], 128, 128, 8
    $region9: #{tpu_custom_call.1} parent=1 // pred_fallthru
      _
    // Predicated region
    $region10: #{tpu_custom_call.1} parent=1 // pred_check
      _
    $region11: #{tpu_custom_call.1} parent=1 // pred_check_branch
      %25 = sbr.rel (0) target = $region13
    $region12: #{tpu_custom_call.1} parent=1 // pred_region
      %26 = dma.done [#allocation4], 256
    $region13: #{tpu_custom_call.1} parent=1 // pred_fallthru
      _
    %s27 = sld [smem:[#allocation2]]
    %p28 = scmp.ne.s32.totalorder %s27, 0
    // Predicated region
    $region14: #{tpu_custom_call.1} parent=1 // pred_check
      %p29 = pneg %p28
    $region15: #{tpu_custom_call.1} parent=1 // pred_check_branch
      %31 = sbr.rel (%p29) target = $region17
    $region16: #{tpu_custom_call.1} parent=1 // pred_region
      %v32 = vld [vmem:[#allocation3] sm:$0xff]
      %v33 = vld [vmem:[#allocation3 + $0x8] sm:$0xff]
      %34 = vst [vmem:[#allocation6] sm:$0xff] %v32
      %35 = vst [vmem:[#allocation6 + $0x8] sm:$0xff] %v33
    $region17: #{tpu_custom_call.1} parent=1 // pred_fallthru
      _
    %s36 = sld [smem:[#allocation2]]
    %p37 = scmp.eq.s32.totalorder %s36, 0
    // Predicated region
    $region18: #{tpu_custom_call.1} parent=1 // pred_check
      %p38 = pneg %p37
    $region19: #{tpu_custom_call.1} parent=1 // pred_check_branch
      %40 = sbr.rel (%p38) target = $region21
    $region20: #{tpu_custom_call.1} parent=1 // pred_region
      %v41 = vld [vmem:[#allocation3] sm:$0xff]
      %v42 = vld [vmem:[#allocation3 + $0x8] sm:$0xff]
      %v43 = vsub.f32 1.0, %v41
      %v44 = vsub.f32 1.0, %v42
      %45 = vst [vmem:[#allocation6] sm:$0xff] %v43
      %46 = vst [vmem:[#allocation6 + $0x8] sm:$0xff] %v44
    $region21: #{tpu_custom_call.1} parent=1 // pred_fallthru
      _
    // Predicated region
    $region22: #{tpu_custom_call.1} parent=1 // pred_check
      _
    $region23: #{tpu_custom_call.1} parent=1 // pred_check_branch
      %48 = sbr.rel (0) target = $region25
    $region24: #{tpu_custom_call.1} parent=1 // pred_region
      %s50 = ssub.s32 256, 256
      %51 = vsyncadd [#allocation5], %s50
      %s52 = sshll.u32 [#allocation6], 4
      %s53 = int_to_ptr.vmem [resolvable:$true] %s52
      %58 = dma.vmem_to_hbm [thread:$0]  %s53, 256, %s2, [#allocation5], 128, 128, 8
    $region25: #{tpu_custom_call.1} parent=1 // pred_fallthru
      _
    // Predicated region
    $region26: #{tpu_custom_call.1} parent=1 // pred_check
      _
    $region27: #{tpu_custom_call.1} parent=1 // pred_check_branch
      %60 = sbr.rel (0) target = $region29
    $region28: #{tpu_custom_call.1} parent=1 // pred_region
      %61 = dma.done [#allocation5], 256
    $region29: #{tpu_custom_call.1} parent=1 // pred_fallthru
      _
    %62 = vsyncpa [#allocation4], 1
    %63 = vsyncpa [#allocation5], 1

</llo_original>
